<compile_context>
chip_gen: v5e
topology: v5e:2x2
jax: 0.10.0
libtpu: 0.0.40
codegen_flags: <defaults>
</compile_context>

<pallas_src>
import functools

import jax
import jax.numpy as jnp
from jax import lax
from jax.experimental import pallas as pl
from jax.experimental.pallas import tpu as pltpu


def _round_up(x, m):
    return ((x + m - 1) // m) * m


def _cdiv(a, b):
    return -(-a // b)


def _mlp_kernel(x_ref, w1t_ref, b1_ref, w2t_ref, b2_ref, o_ref, *,
                chunk, n_chunks, unroll):
    """One N-tile (lane-dense): sigmoid(W2^T @ relu(W1^T @ x + b1) + b2).

    x_ref  : (2, TN) f32    w1t_ref : (H, 2) f32   b1_ref : (H, 1) f32
    w2t_ref: (O, H)  bf16   b2_ref  : (O, 1) f32   o_ref  : (O, TN)
    """
    # Hoist the tiny per-layer constants out of the lane-chunk loop.
    w1t = w1t_ref[...]                      # (H, 2)
    w1_0 = w1t[:, 0:1]                      # (H, 1)
    w1_1 = w1t[:, 1:2]                      # (H, 1)
    b1 = b1_ref[...]                        # (H, 1)
    w2t = w2t_ref[...]                      # (O, H) bf16
    b2 = b2_ref[...]                        # (O, 1)

    def body(c, carry):
        off = c * chunk
        if not isinstance(off, int):
            off = pl.multiple_of(off, chunk)
        x0 = x_ref[0:1, pl.ds(off, chunk)]  # (1, chunk)
        x1 = x_ref[1:2, pl.ds(off, chunk)]  # (1, chunk)

        # Layer 1 on the VPU (K=2 would waste the MXU): broadcast FMAs.
        h = jnp.maximum(w1_0 * x0 + w1_1 * x1 + b1, 0.0)          # (H, chunk) f32

        # Layer 2 on the MXU: bf16 operands, f32 accumulation.
        y = jnp.dot(w2t, h.astype(jnp.bfloat16),
                    preferred_element_type=jnp.float32)           # (O, chunk)
        y = y + b2

        # sigmoid = 1/(1+exp(-y)); exp and approx reciprocal both go to the EUP.
        out = pl.reciprocal(1.0 + jnp.exp(-y), approx=True)
        o_ref[:, pl.ds(off, chunk)] = out.astype(o_ref.dtype)
        return carry

    lax.fori_loop(0, n_chunks, body, 0, unroll=unroll)


@functools.partial(jax.jit,
                   static_argnames=("tile_n", "transpose_output", "out_dtype"))
def pointwise_point_transformer(x, w1, b1, w2, b2, *, tile_n=32768,
                                transpose_output=True, out_dtype=jnp.float32):
    """Pallas implementation of PointwisePointTransformer.forward.

    x  : (N, 2)  float32 diagram points
    w1 : (2, H), b1 : (H,)
    w2 : (H, O), b2 : (O,)
    returns (N, O) if transpose_output else lane-major (O, N)
    """
    n, in_f = x.shape
    hidden = w1.shape[1]
    out_f = w2.shape[1]

    # ---- lane-dense tiling of the point axis -------------------------------
    n128 = _round_up(max(n, 1), 128)
    tile_cap = max(128, min(tile_n, n128))
    num_tiles = _cdiv(n128, tile_cap)
    if n128 >= 256:
        # v7x has 2 TensorCores sharing the 'parallel' grid axis: make sure
        # both get at least one step (harmless on 1-TC v5e/v6e).
        num_tiles = max(num_tiles, 2)
    tile_n = _round_up(_cdiv(n128, num_tiles), 128)
    n_pad = num_tiles * tile_n

    # In-kernel lane chunking keeps the (H, chunk) hidden activation in vregs.
    chunk = 512
    while tile_n % chunk:
        chunk //= 2                           # lands on 512/256/128
    n_chunks = tile_n // chunk
    unroll = min(8, n_chunks)

    # ---- operand prep ------------------------------------------------------
    xt = jnp.transpose(x)                               # (2, N) lane-dense
    if n_pad != n:
        xt = jnp.pad(xt, ((0, 0), (0, n_pad - n)))      # zero-pad tail points

    w1t = jnp.transpose(w1)                             # (H, 2) f32 (VPU layer)
    b1c = b1.reshape(hidden, 1)                         # (H, 1)
    w2t = jnp.transpose(w2).astype(jnp.bfloat16)        # (O, H) bf16 MXU operand
    b2c = b2.reshape(out_f, 1)                          # (O, 1)

    kernel = functools.partial(_mlp_kernel, chunk=chunk,
                               n_chunks=n_chunks, unroll=unroll)

    out_bytes = jnp.dtype(out_dtype).itemsize
    cost = pl.CostEstimate(
        flops=n_pad * (2 * in_f * hidden + 2 * hidden * out_f),
        transcendentals=n_pad * out_f,
        bytes_accessed=(4 * n_pad * in_f
                        + out_bytes * n_pad * out_f
                        + 4 * (in_f * hidden + hidden + out_f)
                        + 2 * hidden * out_f),
    )

    yt = pl.pallas_call(
        kernel,
        out_shape=jax.ShapeDtypeStruct((out_f, n_pad), out_dtype),
        grid_spec=pltpu.PrefetchScalarGridSpec(
            num_scalar_prefetch=0,
            grid=(num_tiles,),
            in_specs=[
                pl.BlockSpec((in_f, tile_n), lambda i: (0, i)),    # x tile (lane-dense)
                pl.BlockSpec((hidden, in_f), lambda i: (0, 0)),    # W1^T (whole)
                pl.BlockSpec((hidden, 1), lambda i: (0, 0)),       # b1 (column)
                pl.BlockSpec((out_f, hidden), lambda i: (0, 0)),   # W2^T (whole, bf16)
                pl.BlockSpec((out_f, 1), lambda i: (0, 0)),        # b2 (column)
            ],
            out_specs=pl.BlockSpec((out_f, tile_n), lambda i: (0, i)),
        ),
        compiler_params=pltpu.CompilerParams(
            dimension_semantics=("parallel",),
            # Double-buffered in/out blocks at tile_n=32768 are ~4.5 MiB and
            # the chunked kernel keeps temps in vregs: comfortably under the
            # v7x scoped default.
            vmem_limit_bytes=32 << 20,
        ),
        cost_estimate=cost,
    )(xt, w1t, b1c, w2t, b2c)

    yt = yt[:, :n]                           # drop padded tail columns
    if transpose_output:
        return jnp.transpose(yt)             # (N, O): module semantics
    return yt                                # (O, N): lane-major, no transpose traffic


def init_params(key, hidden_features, out_features):
    """Deterministic init matching nn.Linear shapes (uniform +-1/sqrt(fan_in))."""
    k1, k2, k3, k4 = jax.random.split(key, 4)
    bound1 = 1.0 / jnp.sqrt(2.0)
    bound2 = 1.0 / jnp.sqrt(float(hidden_features))
    w1 = jax.random.uniform(k1, (2, hidden_features), jnp.float32, -bound1, bound1)
    b1 = jax.random.uniform(k2, (hidden_features,), jnp.float32, -bound1, bound1)
    w2 = jax.random.uniform(k3, (hidden_features, out_features), jnp.float32,
                            -bound2, bound2)
    b2 = jax.random.uniform(k4, (out_features,), jnp.float32, -bound2, bound2)
    return w1, b1, w2, b2


def reference_forward(x, w1, b1, w2, b2):
    h = jnp.maximum(x @ w1 + b1, 0.0)
    return jax.nn.sigmoid(h @ w2 + b2)


if __name__ == "__main__":
    hidden_features = 32
    out_features = 16
    n_points = 300          # deliberately NOT a multiple of 128: exercises tail padding

    key = jax.random.PRNGKey(0)
    k_x, k_p = jax.random.split(key)
    x = jax.random.normal(k_x, (n_points, 2), dtype=jnp.float32)
    # point_index: segmentation map of point -> sample; unused by forward, kept
    # for interface fidelity.
    point_index = jnp.concatenate(
        [jnp.full((n_points // 4,), i, jnp.int32) for i in range(4)]
        + [jnp.full((n_points - 4 * (n_points // 4),), 3, jnp.int32)])

    w1, b1, w2, b2 = init_params(k_p, hidden_features, out_features)

    out = pointwise_point_transformer(x, w1, b1, w2, b2)
    out = jax.block_until_ready(out)

    ref = reference_forward(x, w1, b1, w2, b2)
    assert out.shape == (n_points, out_features)
    # Tolerance deliberately loosened vs the f32 reference: layer-2 runs with
    # bf16 MXU operands (f32 accumulation) and sigmoid uses an approx (~2^-12)
    # EUP reciprocal.  Observed error is O(1e-3); 2e-2 gives ample margin.
    assert jnp.allclose(out, ref, atol=2e-2, rtol=0.0), "mismatch vs reference"

    print("KERNEL_OK")
</pallas_src>

<mosaic_0001>
module attributes {stable_mosaic.version = 11 : i64} {
  func.func @_mlp_kernel(%arg0: i32, %arg1: memref<2x256xf32, #tpu.memory_space<vmem>>, %arg2: memref<32x2xf32, #tpu.memory_space<vmem>>, %arg3: memref<32x1xf32, #tpu.memory_space<vmem>>, %arg4: memref<16x32xbf16, #tpu.memory_space<vmem>>, %arg5: memref<16x1xf32, #tpu.memory_space<vmem>>, %arg6: memref<16x256xf32, #tpu.memory_space<vmem>>) attributes {dimension_semantics = [#tpu.dimension_semantics<parallel>], iteration_bounds = array<i64: 2>, scalar_prefetch = 0 : i64, scratch_operands = 0 : i64, tpu.core_type = #tpu.core_type<tc>, window_params = [{transform_indices = @transform_0, window_bounds = array<i64: 2, 256>}, {pipeline_mode = #tpu.pipeline_mode<synchronous>, transform_indices = @transform_1, window_bounds = array<i64: 32, 2>}, {pipeline_mode = #tpu.pipeline_mode<synchronous>, transform_indices = @transform_2, window_bounds = array<i64: 32, 1>}, {pipeline_mode = #tpu.pipeline_mode<synchronous>, transform_indices = @transform_3, window_bounds = array<i64: 16, 32>}, {pipeline_mode = #tpu.pipeline_mode<synchronous>, transform_indices = @transform_4, window_bounds = array<i64: 16, 1>}, {transform_indices = @transform_5, window_bounds = array<i64: 16, 256>}]} {
    %c0 = arith.constant 0 : index
    %c0_0 = arith.constant 0 : index
    %0 = vector.load %arg2[%c0, %c0_0] : memref<32x2xf32, #tpu.memory_space<vmem>>, vector<32x2xf32>
    %1 = vector.extract_strided_slice %0 {offsets = [0, 0], sizes = [32, 1], strides = [1, 1]} : vector<32x2xf32> to vector<32x1xf32>
    %2 = vector.extract_strided_slice %0 {offsets = [0, 1], sizes = [32, 1], strides = [1, 1]} : vector<32x2xf32> to vector<32x1xf32>
    %c0_1 = arith.constant 0 : index
    %c0_2 = arith.constant 0 : index
    %3 = vector.load %arg3[%c0_1, %c0_2] : memref<32x1xf32, #tpu.memory_space<vmem>>, vector<32x1xf32>
    %c0_3 = arith.constant 0 : index
    %c0_4 = arith.constant 0 : index
    %4 = vector.load %arg4[%c0_3, %c0_4] : memref<16x32xbf16, #tpu.memory_space<vmem>>, vector<16x32xbf16>
    %c0_5 = arith.constant 0 : index
    %c0_6 = arith.constant 0 : index
    %5 = vector.load %arg5[%c0_5, %c0_6] : memref<16x1xf32, #tpu.memory_space<vmem>>, vector<16x1xf32>
    %c0_i32 = arith.constant 0 : i32
    %c256_i32 = arith.constant 256 : i32
    %6 = arith.muli %c0_i32, %c256_i32 : i32
    %7 = tpu.assume_multiple %6, 256 : i32
    %c0_7 = arith.constant 0 : index
    %8 = arith.index_cast %7 : i32 to index
    %9 = vector.load %arg1[%c0_7, %8] : memref<2x256xf32, #tpu.memory_space<vmem>>, vector<1x256xf32>
    %c1 = arith.constant 1 : index
    %10 = arith.index_cast %7 : i32 to index
    %11 = vector.load %arg1[%c1, %10] : memref<2x256xf32, #tpu.memory_space<vmem>>, vector<1x256xf32>
    %12 = vector.broadcast %1 : vector<32x1xf32> to vector<32x256xf32>
    %13 = vector.broadcast %9 : vector<1x256xf32> to vector<32x256xf32>
    %14 = arith.mulf %12, %13 : vector<32x256xf32>
    %15 = vector.broadcast %2 : vector<32x1xf32> to vector<32x256xf32>
    %16 = vector.broadcast %11 : vector<1x256xf32> to vector<32x256xf32>
    %17 = arith.mulf %15, %16 : vector<32x256xf32>
    %18 = arith.addf %14, %17 : vector<32x256xf32>
    %19 = vector.broadcast %3 : vector<32x1xf32> to vector<32x256xf32>
    %20 = arith.addf %18, %19 : vector<32x256xf32>
    %cst = arith.constant 0.000000e+00 : f32
    %21 = vector.broadcast %cst : f32 to vector<32x256xf32>
    %22 = arith.maximumf %20, %21 : vector<32x256xf32>
    %23 = arith.truncf %22 : vector<32x256xf32> to vector<32x256xbf16>
    %cst_8 = arith.constant dense<0.000000e+00> : vector<16x256xf32>
    %24 = tpu.matmul %4, %23, %cst_8 {dimension_numbers = #tpu.dot_dimension_numbers<[1], [0], [0], [1], [0, 0, 1, 1], [], []>} : vector<16x32xbf16>, vector<32x256xbf16>, vector<16x256xf32> -> vector<16x256xf32>
    %25 = vector.broadcast %5 : vector<16x1xf32> to vector<16x256xf32>
    %26 = arith.addf %24, %25 : vector<16x256xf32>
    %cst_9 = arith.constant 0.000000e+00 : f32
    %27 = vector.broadcast %cst_9 : f32 to vector<16x256xf32>
    %28 = arith.subf %27, %26 : vector<16x256xf32>
    %29 = math.exp %28 : vector<16x256xf32>
    %cst_10 = arith.constant 1.000000e+00 : f32
    %30 = vector.broadcast %cst_10 : f32 to vector<16x256xf32>
    %31 = arith.addf %30, %29 : vector<16x256xf32>
    %32 = tpu.reciprocal %31 {approx = true} : vector<16x256xf32> -> vector<16x256xf32>
    %c0_11 = arith.constant 0 : index
    %33 = arith.index_cast %7 : i32 to index
    %34 = vector.load %arg6[%c0_11, %33] : memref<16x256xf32, #tpu.memory_space<vmem>>, vector<16x256xf32>
    tpu.vector_store %arg6[%c0_11, %33], %32 {strides = array<i32>} : memref<16x256xf32, #tpu.memory_space<vmem>>, vector<16x256xf32>,
    %c1_i32 = arith.constant 1 : i32
    return
  }
  func.func @transform_0(%arg0: i32) -> (i32, i32) {
    %c0_i32 = arith.constant 0 : i32
    %c0_i32_0 = arith.constant 0 : i32
    return %c0_i32, %arg0 : i32, i32
  }
  func.func @transform_1(%arg0: i32) -> (i32, i32) {
    %c0_i32 = arith.constant 0 : i32
    %c0_i32_0 = arith.constant 0 : i32
    %c0_i32_1 = arith.constant 0 : i32
    return %c0_i32, %c0_i32_0 : i32, i32
  }
  func.func @transform_2(%arg0: i32) -> (i32, i32) {
    %c0_i32 = arith.constant 0 : i32
    %c0_i32_0 = arith.constant 0 : i32
    %c0_i32_1 = arith.constant 0 : i32
    return %c0_i32, %c0_i32_0 : i32, i32
  }
  func.func @transform_3(%arg0: i32) -> (i32, i32) {
    %c0_i32 = arith.constant 0 : i32
    %c0_i32_0 = arith.constant 0 : i32
    %c0_i32_1 = arith.constant 0 : i32
    return %c0_i32, %c0_i32_0 : i32, i32
  }
  func.func @transform_4(%arg0: i32) -> (i32, i32) {
    %c0_i32 = arith.constant 0 : i32
    %c0_i32_0 = arith.constant 0 : i32
    %c0_i32_1 = arith.constant 0 : i32
    return %c0_i32, %c0_i32_0 : i32, i32
  }
  func.func @transform_5(%arg0: i32) -> (i32, i32) {
    %c0_i32 = arith.constant 0 : i32
    %c0_i32_0 = arith.constant 0 : i32
    return %c0_i32, %arg0 : i32, i32
  }
}

</mosaic_0001>

<llo_original>
// kernel: pointwise_point_transformer.1
$region0: #{pointwise_point_transformer.1}
  #allocation0 [shape = 'u32[]', space=smem, size = 0x4, offset = 0x4, fixed_abs, tag = 'smem constant byte address 0x4 - core index']
  #allocation1 [shape = 'u32[72,128]{1,0:T(1,128)}', space=vmem, size = 0x9000, scoped, tag = 'internal scratch']
  %s0 = inlined_call_operand.vmem [shape: f32[2,512], index: 0, kind: input, shape index: {}]
  %s1 = inlined_call_operand.vmem [shape: f32[32,2], index: 1, kind: input, shape index: {}]
  %s2 = inlined_call_operand.vmem [shape: f32[32,1], index: 2, kind: input, shape index: {}]
  %s3 = inlined_call_operand.vmem [shape: bf16[16,32], index: 3, kind: input, shape index: {}]
  %s4 = inlined_call_operand.vmem [shape: f32[16,1], index: 4, kind: input, shape index: {}]
  %s5 = inlined_call_operand.vmem [shape: f32[16,512], index: 5, kind: output, shape index: {}]
  %s6 = sld [smem:[#allocation0]]
  $region72: #{pointwise_point_transformer.1} parent=0
    _
  %s8 = ssub.s32 1, %s6
  %s9 = scalar_select 0, %s8, %s6
  $region1: #{pointwise_point_transformer.1} parent=0
    #allocation2 [shape = 'u8[32768]{0}', space=vmem, size = 0x8000, scoped, tag = 'output window, operand 0']
    loop: start=0, step=1, limit=4
    $region2: #{pointwise_point_transformer.1} parent=1 // loop_pre_header
      _
    $region3: #{pointwise_point_transformer.1} parent=1 // loop_header
      %s11 = sphi 0, %s15
      %p12 = scmp.ge.s32.totalorder %s11, 4
      %s21 = sphi 0, %s23
      %s24 = sphi 0, %s21
      %s25 = sphi 0, %s24
      %s41 = sphi 0, %s25
      %s45 = sphi 0, %s45
      %s47 = sphi 0, %s45
      %s48 = sphi 0, %s47
      %s62 = sphi 0, %s48
      %s66 = sphi 0, %s66
      %s68 = sphi 0, %s66
      %s69 = sphi 0, %s68
      %s83 = sphi 0, %s69
      %s87 = sphi 0, %s87
      %s89 = sphi 0, %s87
      %s90 = sphi 0, %s89
      %s104 = sphi 0, %s90
      %s108 = sphi 0, %s108
      %s110 = sphi 0, %s108
      %s111 = sphi 0, %s110
      %s125 = sphi 0, %s111
      %s131 = sphi 0, %s133
      %s134 = sphi 0, %s131
      %s135 = sphi 0, %s134
      %s151 = sphi 0, %s135
    $region4: #{pointwise_point_transformer.1} parent=1 // loop_header_branch
      %14 = sbr.rel (%p12) target = $region8
    $region5: #{pointwise_point_transformer.1} parent=1 // loop_body
      %s16 = ssub.s32 %s11, 1
      %s17 = ssub.s32 %s11, 2
      %s18 = sadd.s32 %s11, 1
      %s19 = ssub.s32 %s11, %s18
      %p20 = scmp.eq.s32.totalorder %s19, 0
      %s22 = sadd.s32 %s21, 1
      %s23 = scalar_select %p20, %s21, %s22
      %p26 = pneg %p20
      %p27 = scmp.eq.s32.totalorder %s11, 1
      %p28 = por %p26, %p27
      %p29 = scmp.ne.s32.totalorder %s21, %s24
      %p30 = scmp.eq.s32.totalorder %s11, 0
      %p31 = por %p29, %p30
      %p32 = scmp.ne.s32.totalorder %s21, %s24
      %p33 = scmp.eq.s32.totalorder %s16, 1
      %p34 = por %p32, %p33
      %p35 = scmp.ne.s32.totalorder %s24, %s25
      %p36 = scmp.eq.s32.totalorder %s16, 0
      %p37 = por %p35, %p36
      %p38 = scmp.ne.s32.totalorder %s24, %s25
      %p39 = scmp.eq.s32.totalorder %s17, 1
      %p40 = por %p38, %p39
      %p42 = scmp.ne.s32.totalorder %s25, %s41
      %p43 = scmp.eq.s32.totalorder %s17, 0
      %p44 = por %p42, %p43
      %s46 = sadd.s32 %s45, 1
      %p49 = scmp.eq.s32.totalorder %s11, 1
      %p50 = scmp.ne.s32.totalorder %s45, %s47
      %p51 = scmp.eq.s32.totalorder %s11, 0
      %p52 = por %p50, %p51
      %p53 = scmp.ne.s32.totalorder %s45, %s47
      %p54 = scmp.eq.s32.totalorder %s16, 1
      %p55 = por %p53, %p54
      %p56 = scmp.ne.s32.totalorder %s47, %s48
      %p57 = scmp.eq.s32.totalorder %s16, 0
      %p58 = por %p56, %p57
      %p59 = scmp.ne.s32.totalorder %s47, %s48
      %p60 = scmp.eq.s32.totalorder %s17, 1
      %p61 = por %p59, %p60
      %p63 = scmp.ne.s32.totalorder %s48, %s62
      %p64 = scmp.eq.s32.totalorder %s17, 0
      %p65 = por %p63, %p64
      %s67 = sadd.s32 %s66, 1
      %p70 = scmp.eq.s32.totalorder %s11, 1
      %p71 = scmp.ne.s32.totalorder %s66, %s68
      %p72 = scmp.eq.s32.totalorder %s11, 0
      %p73 = por %p71, %p72
      %p74 = scmp.ne.s32.totalorder %s66, %s68
      %p75 = scmp.eq.s32.totalorder %s16, 1
      %p76 = por %p74, %p75
      %p77 = scmp.ne.s32.totalorder %s68, %s69
      %p78 = scmp.eq.s32.totalorder %s16, 0
      %p79 = por %p77, %p78
      %p80 = scmp.ne.s32.totalorder %s68, %s69
      %p81 = scmp.eq.s32.totalorder %s17, 1
      %p82 = por %p80, %p81
      %p84 = scmp.ne.s32.totalorder %s69, %s83
      %p85 = scmp.eq.s32.totalorder %s17, 0
      %p86 = por %p84, %p85
      %s88 = sadd.s32 %s87, 1
      %p91 = scmp.eq.s32.totalorder %s11, 1
      %p92 = scmp.ne.s32.totalorder %s87, %s89
      %p93 = scmp.eq.s32.totalorder %s11, 0
      %p94 = por %p92, %p93
      %p95 = scmp.ne.s32.totalorder %s87, %s89
      %p96 = scmp.eq.s32.totalorder %s16, 1
      %p97 = por %p95, %p96
      %p98 = scmp.ne.s32.totalorder %s89, %s90
      %p99 = scmp.eq.s32.totalorder %s16, 0
      %p100 = por %p98, %p99
      %p101 = scmp.ne.s32.totalorder %s89, %s90
      %p102 = scmp.eq.s32.totalorder %s17, 1
      %p103 = por %p101, %p102
      %p105 = scmp.ne.s32.totalorder %s90, %s104
      %p106 = scmp.eq.s32.totalorder %s17, 0
      %p107 = por %p105, %p106
      %s109 = sadd.s32 %s108, 1
      %p112 = scmp.eq.s32.totalorder %s11, 1
      %p113 = scmp.ne.s32.totalorder %s108, %s110
      %p114 = scmp.eq.s32.totalorder %s11, 0
      %p115 = por %p113, %p114
      %p116 = scmp.ne.s32.totalorder %s108, %s110
      %p117 = scmp.eq.s32.totalorder %s16, 1
      %p118 = por %p116, %p117
      %p119 = scmp.ne.s32.totalorder %s110, %s111
      %p120 = scmp.eq.s32.totalorder %s16, 0
      %p121 = por %p119, %p120
      %p122 = scmp.ne.s32.totalorder %s110, %s111
      %p123 = scmp.eq.s32.totalorder %s17, 1
      %p124 = por %p122, %p123
      %p126 = scmp.ne.s32.totalorder %s111, %s125
      %p127 = scmp.eq.s32.totalorder %s17, 0
      %p128 = por %p126, %p127
      %s129 = ssub.s32 %s11, %s18
      %p130 = scmp.eq.s32.totalorder %s129, 0
      %s132 = sadd.s32 %s131, 1
      %s133 = scalar_select %p130, %s131, %s132
      %p136 = pneg %p130
      %p137 = scmp.eq.s32.totalorder %s11, 1
      %p138 = por %p136, %p137
      %p139 = scmp.ne.s32.totalorder %s131, %s134
      %p140 = scmp.eq.s32.totalorder %s11, 0
      %p141 = por %p139, %p140
      %p142 = scmp.ne.s32.totalorder %s131, %s134
      %p143 = scmp.eq.s32.totalorder %s16, 1
      %p144 = por %p142, %p143
      %p145 = scmp.ne.s32.totalorder %s134, %s135
      %p146 = scmp.eq.s32.totalorder %s16, 0
      %p147 = por %p145, %p146
      %p148 = scmp.ne.s32.totalorder %s134, %s135
      %p149 = scmp.eq.s32.totalorder %s17, 1
      %p150 = por %p148, %p149
      %p152 = scmp.ne.s32.totalorder %s135, %s151
      %p153 = scmp.eq.s32.totalorder %s17, 0
      %p154 = por %p152, %p153
      %p155 = scmp.le.s32.totalorder 1, %s11
      %p156 = scmp.lt.s32.totalorder %s11, 3
      %p157 = pnand %p155, %p156
      %p158 = pneg %p157
      // Predicated region
      $region9: #{pointwise_point_transformer.1} parent=5 // pred_check
        _
      $region10: #{pointwise_point_transformer.1} parent=5 // pred_check_branch
        %160 = sbr.rel (%p157) target = $region12
      $region11: #{pointwise_point_transformer.1} parent=5 // pred_region
        %s161 = ssub.s32 %s11, 1
        // Predicated region
        $region13: #{pointwise_point_transformer.1} parent=11 // pred_check
          %p162 = pneg %p58
        $region14: #{pointwise_point_transformer.1} parent=11 // pred_check_branch
          %164 = sbr.rel (%p162) target = $region16
        $region15: #{pointwise_point_transformer.1} parent=11 // pred_region
          _
        $region16: #{pointwise_point_transformer.1} parent=11 // pred_fallthru
          _
        // Predicated region
        $region17: #{pointwise_point_transformer.1} parent=11 // pred_check
          %p165 = pneg %p79
        $region18: #{pointwise_point_transformer.1} parent=11 // pred_check_branch
          %167 = sbr.rel (%p165) target = $region20
        $region19: #{pointwise_point_transformer.1} parent=11 // pred_region
          _
        $region20: #{pointwise_point_transformer.1} parent=11 // pred_fallthru
          _
        // Predicated region
        $region21: #{pointwise_point_transformer.1} parent=11 // pred_check
          %p168 = pneg %p100
        $region22: #{pointwise_point_transformer.1} parent=11 // pred_check_branch
          %170 = sbr.rel (%p168) target = $region24
        $region23: #{pointwise_point_transformer.1} parent=11 // pred_region
          _
        $region24: #{pointwise_point_transformer.1} parent=11 // pred_fallthru
          _
        // Predicated region
        $region25: #{pointwise_point_transformer.1} parent=11 // pred_check
          %p171 = pneg %p121
        $region26: #{pointwise_point_transformer.1} parent=11 // pred_check_branch
          %173 = sbr.rel (%p171) target = $region28
        $region27: #{pointwise_point_transformer.1} parent=11 // pred_region
          _
        $region28: #{pointwise_point_transformer.1} parent=11 // pred_fallthru
          _
      $region12: #{pointwise_point_transformer.1} parent=5 // pred_fallthru
        _
      %p174 = scmp.lt.s32.totalorder %s11, 2
      // Predicated region
      $region29: #{pointwise_point_transformer.1} parent=5 // pred_check
        %p175 = pneg %p174
      $region30: #{pointwise_point_transformer.1} parent=5 // pred_check_branch
        %177 = sbr.rel (%p175) target = $region32
      $region31: #{pointwise_point_transformer.1} parent=5 // pred_region
        // Predicated region
        $region33: #{pointwise_point_transformer.1} parent=31 // pred_check
          %p178 = pneg %p31
        $region34: #{pointwise_point_transformer.1} parent=31 // pred_check_branch
          %180 = sbr.rel (%p178) target = $region36
        $region35: #{pointwise_point_transformer.1} parent=31 // pred_region
          %s181 = smul.u32 2, %s11
          %p182 = scmp.lt.s32.totalorder %s181, 3
          %s183 = scalar_select %p182, %s181, 3
          %s184 = smul.addr %s183, 2
          %s185 = scalar_lea.vmem %s0, %s184
          %s186 = smul.u32 2, %s11
        $region36: #{pointwise_point_transformer.1} parent=31 // pred_fallthru
          _
      $region32: #{pointwise_point_transformer.1} parent=5 // pred_fallthru
        _
      %p187 = scmp.le.s32.totalorder 1, %s11
      %p188 = scmp.lt.s32.totalorder %s11, 3
      %p189 = pnand %p187, %p188
      %p190 = pneg %p189
      // Predicated region
      $region37: #{pointwise_point_transformer.1} parent=5 // pred_check
        _
      $region38: #{pointwise_point_transformer.1} parent=5 // pred_check_branch
        %192 = sbr.rel (%p189) target = $region40
      $region39: #{pointwise_point_transformer.1} parent=5 // pred_region
        %s193 = ssub.s32 %s11, 1
        %s194 = smul.u32 2, %s16
        %p195 = scmp.lt.s32.totalorder %s194, 3
        %s196 = scalar_select %p195, %s194, 3
        %s197 = smul.addr %s196, 2
        %s198 = scalar_lea.vmem %s0, %s197
        %p199 = pneg %p37
        %p200 = pneg %p34
        %p201 = pneg %p58
        %p202 = pneg %p55
        %p203 = pneg %p79
        %p204 = pneg %p76
        %p205 = pneg %p100
        %p206 = pneg %p97
        %p207 = pneg %p121
        %p208 = pneg %p118
        %p209 = pneg %p147
        %p210 = pneg %p144
        %s211 = sand.u32 %s134, 1
        %s212 = sand.u32 %s134, 1
        %s213 = smul.addr %s212, 32
        %s214 = scalar_lea.vmem [#allocation2], %s213
        %s215 = smul.u32 2, %s16
        %p216 = scmp.lt.s32.totalorder %s215, 3
        %s217 = scalar_select %p216, %s215, 3
        %s218 = smul.addr %s217, 2
        %s219 = scalar_lea.vmem %s0, %s218
        %s220 = smul.u32 2, %s16
        %s221 = smul.u32 2, %s16
        %v223 = vld [vmem:[%s1] sm:$0xff]
        %v224 = vld [vmem:[%s1 + $0x8] sm:$0xff]
        %v225 = vld [vmem:[%s1 + $0x10] sm:$0xff]
        %v226 = vld [vmem:[%s1 + $0x18] sm:$0xff]
        %v227 = vld [vmem:[%s2] sm:$0xff]
        %v228 = vld [vmem:[%s2 + $0x8] sm:$0xff]
        %v229 = vld [vmem:[%s2 + $0x10] sm:$0xff]
        %v230 = vld [vmem:[%s2 + $0x18] sm:$0xff]
        %v231 = vld [vmem:[%s3] sm:$0xf]
        %v232 = vld [vmem:[%s3 + $0x4] sm:$0xf]
        %v233 = vld [vmem:[%s4] sm:$0xff]
        %v234 = vld [vmem:[%s4 + $0x8] sm:$0xff]
        %v235 = vld [vmem:[%s219] ss:$2 sm:$0x3]
        %s236 = scalar_lea.vmem %s219, 1
        %v237 = vld [vmem:[%s236] ss:$2 sm:$0x3]
        %239 = vset.pattern.permute.xlu0 0
        %240 = vperm.xlu0 %239, %v223
        %v241 = vpop.permute.xlu0 %240
        %244 = vset.pattern.permute.xlu0 0
        %245 = vperm.xlu0 %244, %v224
        %v246 = vpop.permute.xlu0 %245
        %249 = vset.pattern.permute.xlu0 0
        %250 = vperm.xlu0 %249, %v225
        %v251 = vpop.permute.xlu0 %250
        %254 = vset.pattern.permute.xlu0 0
        %255 = vperm.xlu0 %254, %v226
        %v256 = vpop.permute.xlu0 %255
        %v259 = vperm.slane %v235, 0
        %v260 = vperm.slane %v235, 1
        %v263 = vmul.f32 %v241, %v259
        %v264 = vmul.f32 %v241, %v260
        %v265 = vmul.f32 %v246, %v259
        %v266 = vmul.f32 %v246, %v260
        %v267 = vmul.f32 %v251, %v259
        %v268 = vmul.f32 %v251, %v260
        %v269 = vmul.f32 %v256, %v259
        %v270 = vmul.f32 %v256, %v260
        %271 = vset.pattern.permute.xlu0 1
        %272 = vperm.xlu0 %271, %v223
        %v273 = vpop.permute.xlu0 %272
        %275 = vset.pattern.permute.xlu0 1
        %276 = vperm.xlu0 %275, %v224
        %v277 = vpop.permute.xlu0 %276
        %279 = vset.pattern.permute.xlu0 1
        %280 = vperm.xlu0 %279, %v225
        %v281 = vpop.permute.xlu0 %280
        %283 = vset.pattern.permute.xlu0 1
        %284 = vperm.xlu0 %283, %v226
        %v285 = vpop.permute.xlu0 %284
        %v288 = vperm.slane %v237, 0
        %v289 = vperm.slane %v237, 1
        %v292 = vmul.f32 %v273, %v288
        %v293 = vmul.f32 %v273, %v289
        %v294 = vmul.f32 %v277, %v288
        %v295 = vmul.f32 %v277, %v289
        %v296 = vmul.f32 %v281, %v288
        %v297 = vmul.f32 %v281, %v289
        %v298 = vmul.f32 %v285, %v288
        %v299 = vmul.f32 %v285, %v289
        %v300 = vadd.f32 %v263, %v292
        %v301 = vadd.f32 %v264, %v293
        %v302 = vadd.f32 %v265, %v294
        %v303 = vadd.f32 %v266, %v295
        %v304 = vadd.f32 %v267, %v296
        %v305 = vadd.f32 %v268, %v297
        %v306 = vadd.f32 %v269, %v298
        %v307 = vadd.f32 %v270, %v299
        %309 = vset.pattern.permute.xlu0 0
        %310 = vperm.xlu0 %309, %v227
        %v311 = vpop.permute.xlu0 %310
        %314 = vset.pattern.permute.xlu0 0
        %315 = vperm.xlu0 %314, %v228
        %v316 = vpop.permute.xlu0 %315
        %319 = vset.pattern.permute.xlu0 0
        %320 = vperm.xlu0 %319, %v229
        %v321 = vpop.permute.xlu0 %320
        %324 = vset.pattern.permute.xlu0 0
        %325 = vperm.xlu0 %324, %v230
        %v326 = vpop.permute.xlu0 %325
        %v328 = vadd.f32 %v300, %v311
        %v329 = vadd.f32 %v301, %v311
        %v330 = vadd.f32 %v302, %v316
        %v331 = vadd.f32 %v303, %v316
        %v332 = vadd.f32 %v304, %v321
        %v333 = vadd.f32 %v305, %v321
        %v334 = vadd.f32 %v306, %v326
        %v335 = vadd.f32 %v307, %v326
        %v336 = vmax.f32 %v328, 0.0
        %v337 = vmax.f32 %v329, 0.0
        %v338 = vmax.f32 %v330, 0.0
        %v339 = vmax.f32 %v331, 0.0
        %v340 = vmax.f32 %v332, 0.0
        %v341 = vmax.f32 %v333, 0.0
        %v342 = vmax.f32 %v334, 0.0
        %v343 = vmax.f32 %v335, 0.0
        %v344 = vpack.c.bf16 %v338, %v336
        %v345 = vpack.c.bf16 %v339, %v337
        %v346 = vpack.c.bf16 %v342, %v340
        %v347 = vpack.c.bf16 %v343, %v341
        %349 = vset.pattern.permute.xlu0 0
        %350 = vperm.xlu0 %349, %v233
        %v351 = vpop.permute.xlu0 %350
        %354 = vset.pattern.permute.xlu0 0
        %355 = vperm.xlu0 %354, %v234
        %v356 = vpop.permute.xlu0 %355
        %v360 = vunpack.c.l.b16 %v231
        %v361 = vunpack.c.l.b16 %v232
        %v362 = vpack.c.b16 %v361, %v360
        %vm363 = vcmask 261120
        %v365 = vsel %vm363, %v362, 0
        %367 = vmatpush.bf16.msra.mxu0 0
        %368 = vmatpush.bf16.msra.mxu0 0
        %369 = vmatpush.bf16.msra.mxu0 0
        %370 = vmatpush.bf16.msra.mxu0 0
        %371 = vmatpush.bf16.msra.mxu0 0
        %372 = vmatpush.bf16.msra.mxu0 0
        %373 = vmatpush.bf16.msra.mxu0 %v346
        %374 = vmatpush.bf16.msra.mxu0 %v344
        %375 = vmatmul.bf16.gmra.mxu0 %v365
        %v376 = vpop.f32.mrf.mxu0
        %v377 = vadd.f32 %v351, %v376
        %v378 = vpop.f32.mrf.mxu0
        %v379 = vadd.f32 %v356, %v378
        %380 = vdwg.mxu0
        %381 = vmatpush.bf16.msra.mxu0 0
        %382 = vmatpush.bf16.msra.mxu0 0
        %383 = vmatpush.bf16.msra.mxu0 0
        %384 = vmatpush.bf16.msra.mxu0 0
        %385 = vmatpush.bf16.msra.mxu0 0
        %386 = vmatpush.bf16.msra.mxu0 0
        %387 = vmatpush.bf16.msra.mxu0 %v347
        %388 = vmatpush.bf16.msra.mxu0 %v345
        %389 = vmatmul.bf16.gmra.mxu0 %v365
        %v390 = vpop.f32.mrf.mxu0
        %v391 = vadd.f32 %v351, %v390
        %v392 = vpop.f32.mrf.mxu0
        %v393 = vadd.f32 %v356, %v392
        %394 = vdwg.mxu0
        %v395 = vsub.f32 0.0, %v377
        %v396 = vsub.f32 0.0, %v391
        %v397 = vsub.f32 0.0, %v379
        %v398 = vsub.f32 0.0, %v393
        %v399 = vmul.f32 %v395, 1.442695
        %v400 = vpow.pop %v399
        %v401 = vmul.f32 %v396, 1.442695
        %v402 = vpow.pop %v401
        %v403 = vmul.f32 %v397, 1.442695
        %v404 = vpow.pop %v403
        %v405 = vmul.f32 %v398, 1.442695
        %v406 = vpow.pop %v405
        %v407 = vadd.f32 %v400, 1.0
        %v408 = vadd.f32 %v402, 1.0
        %v409 = vadd.f32 %v404, 1.0
        %v410 = vadd.f32 %v406, 1.0
        %v411 = vrcp.pop %v407
        %v412 = vrcp.pop %v408
        %v413 = vrcp.pop %v409
        %v414 = vrcp.pop %v410
        %415 = vst [vmem:[%s214] sm:$0xff] %v411
        %416 = vst [vmem:[%s214 + $0x8] sm:$0xff] %v412
        %417 = vst [vmem:[%s214 + $0x10] sm:$0xff] %v413
        %418 = vst [vmem:[%s214 + $0x18] sm:$0xff] %v414
        %s419 = sand.u32 %s134, 1
        %s420 = sand.u32 %s134, 1
        %s421 = smul.addr %s420, 32
        %s422 = scalar_lea.vmem [#allocation2], %s421
        // Predicated region
        $region41: #{pointwise_point_transformer.1} parent=39 // pred_check
          %p423 = pneg %p144
        $region42: #{pointwise_point_transformer.1} parent=39 // pred_check_branch
          %425 = sbr.rel (%p423) target = $region44
        $region43: #{pointwise_point_transformer.1} parent=39 // pred_region
          %s426 = smul.u32 2, %s16
          %s427 = smul.addr %s426, 8
          %s428 = scalar_lea.vmem %s5, %s427
          // Predicated region
          $region45: #{pointwise_point_transformer.1} parent=43 // pred_check
            _
          $region46: #{pointwise_point_transformer.1} parent=43 // pred_check_branch
            %430 = sbr.rel (0) target = $region48
          $region47: #{pointwise_point_transformer.1} parent=43 // pred_region
            // Predicated region
            $region49: #{pointwise_point_transformer.1} parent=47 // pred_check
              _
            $region50: #{pointwise_point_transformer.1} parent=47 // pred_check_branch
              %432 = sbr.rel (0) target = $region52
            $region51: #{pointwise_point_transformer.1} parent=47 // pred_region
              loop: start=0, step=1, limit=1
              $region53: #{pointwise_point_transformer.1} parent=51 // loop_pre_header
                _
              $region54: #{pointwise_point_transformer.1} parent=51 // loop_header
                %s434 = sphi 0, %s438
                %p435 = scmp.ge.s32.totalorder %s434, 1
                %s439 = sphi %s422, %s422
                %s440 = sphi %s428, %s428
              $region55: #{pointwise_point_transformer.1} parent=51 // loop_header_branch
                %437 = sbr.rel (%p435) target = $region59
              $region56: #{pointwise_point_transformer.1} parent=51 // loop_body
                %v441 = vld [vmem:[%s439] sm:$0xff]
                %442 = vst [vmem:[%s440] sm:$0xff] %v441
                %v443 = vld [vmem:[%s439 + $0x8] sm:$0xff]
                %444 = vst [vmem:[%s440 + $0x8] sm:$0xff] %v443
                %v445 = vld [vmem:[%s439 + $0x10] sm:$0xff]
                %446 = vst [vmem:[%s440 + $0x20] sm:$0xff] %v445
                %v447 = vld [vmem:[%s439 + $0x18] sm:$0xff]
                %448 = vst [vmem:[%s440 + $0x28] sm:$0xff] %v447
              $region57: #{pointwise_point_transformer.1} parent=51 // loop_footer
                %s438 = sadd.s32 1, %s434
              $region58: #{pointwise_point_transformer.1} parent=51 // loop_footer_branch
                %433 = sbr.rel target = $region54
              $region59: #{pointwise_point_transformer.1} parent=51 // loop_exit
                _
            $region52: #{pointwise_point_transformer.1} parent=47 // pred_fallthru
              _
            // Predicated region
            $region60: #{pointwise_point_transformer.1} parent=47 // pred_check
              _
            $region61: #{pointwise_point_transformer.1} parent=47 // pred_check_branch
              %450 = sbr.rel target = $region63
            $region62: #{pointwise_point_transformer.1} parent=47 // pred_region
              _
            $region63: #{pointwise_point_transformer.1} parent=47 // pred_fallthru
              _
          $region48: #{pointwise_point_transformer.1} parent=43 // pred_fallthru
            _
          %451 = vnop
        $region44: #{pointwise_point_transformer.1} parent=39 // pred_fallthru
          _
      $region40: #{pointwise_point_transformer.1} parent=5 // pred_fallthru
        _
      %p452 = scmp.le.s32.totalorder 2, %s11
      // Predicated region
      $region64: #{pointwise_point_transformer.1} parent=5 // pred_check
        %p453 = pneg %p452
      $region65: #{pointwise_point_transformer.1} parent=5 // pred_check_branch
        %455 = sbr.rel (%p453) target = $region67
      $region66: #{pointwise_point_transformer.1} parent=5 // pred_region
        %s456 = ssub.s32 %s11, 2
        // Predicated region
        $region68: #{pointwise_point_transformer.1} parent=66 // pred_check
          %p457 = pneg %p150
        $region69: #{pointwise_point_transformer.1} parent=66 // pred_check_branch
          %459 = sbr.rel (%p457) target = $region71
        $region70: #{pointwise_point_transformer.1} parent=66 // pred_region
          %s460 = sand.u32 %s135, 1
          %s461 = sand.u32 %s135, 1
          %s462 = smul.addr %s461, 32
          %s463 = scalar_lea.vmem [#allocation2], %s462
        $region71: #{pointwise_point_transformer.1} parent=66 // pred_fallthru
          _
      $region67: #{pointwise_point_transformer.1} parent=5 // pred_fallthru
        _
    $region6: #{pointwise_point_transformer.1} parent=1 // loop_footer
      %s15 = sadd.s32 1, %s11
    $region7: #{pointwise_point_transformer.1} parent=1 // loop_footer_branch
      %10 = sbr.rel target = $region3
    $region8: #{pointwise_point_transformer.1} parent=1 // loop_exit
      _

</llo_original>
